<compile_context>
chip_gen: v6e
topology: v6e:2x2x1
jax: 0.10.0
libtpu: 0.0.40
codegen_flags: <defaults>
</compile_context>

<pallas_src>
import jax
import jax.numpy as jnp
from jax.experimental import pallas as pl
from jax.experimental.pallas import tpu as pltpu


def _round_up(x, m):
    return ((x + m - 1) // m) * m


# Minimum sublane multiple for the batch-tile dim, per score itemsize.
_SUBLANE = {4: 8, 2: 16, 1: 32}

# Conservative VMEM budget for the double-buffered blocks (worst-case lane
# padding assumed).  Fits v7x's 64 MiB physical VMEM and v5e/v6e with the
# explicitly raised scoped limit below.
_VMEM_BLOCK_BUDGET = 24 * 1024 * 1024
_VMEM_LIMIT_BYTES = 48 * 1024 * 1024


def _pick_batch_tile(b, n, itemsize):
    """Pick the batch-tile (sublane) size TB for a (B, N) score matrix."""
    m = _SUBLANE.get(itemsize, 8)
    if b < m:
        return b  # single block == full array dims (always a legal block shape)
    lanes = _round_up(n, 128)
    # Per-example VMEM bytes, double buffered: scores + labels(i32) + out(f32),
    # each assumed lane-padded to 128.
    per_ex = 2 * (lanes * itemsize + 128 * 4 + 128 * 4)
    cap = (_VMEM_BLOCK_BUDGET // per_ex) // m * m
    cap = int(min(max(cap, m), 32768))
    if b > cap:
        return cap  # grid = cdiv(b, cap); ragged last block is masked by Pallas
    if b >= 256:
        # Keep >= 2 grid steps so v7x's two TensorCores both get work.
        return _round_up(pl.cdiv(b, 2), m)
    return b


def _soft_rank_ce_kernel(labels_ref, scores_ref, out_ref):
    # labels_ref: (TB, 1) int32   label per example
    # scores_ref: (TB, N) native dtype (f32 / bf16 / fp16)
    # out_ref:    (TB, 1) float32 per-example loss
    labels = labels_ref[...]                                   # (TB, 1)
    scores = scores_ref[...].astype(jnp.float32)               # cast in-kernel
    col = jax.lax.broadcasted_iota(jnp.int32, scores.shape, 1)
    selected = jnp.where(col == labels, scores, jnp.zeros_like(scores))
    true_score = jnp.sum(selected, axis=1, keepdims=True)      # (TB, 1)
    out_ref[...] = -jnp.log(true_score + jnp.float32(1e-10))


def soft_rank_cross_entropy_loss_batch(top_scores, true_labels):
    """top_scores: (B, N) float (any float dtype — NOT upcast here);
       true_labels: (B,) int.  Returns (B,) float32 losses."""
    scores = jnp.asarray(top_scores)            # keep native dtype
    labels = jnp.asarray(true_labels, jnp.int32)
    b, n = scores.shape
    itemsize = scores.dtype.itemsize

    tb = _pick_batch_tile(b, n, itemsize)
    grid = (pl.cdiv(b, tb),)

    labels_2d = labels.reshape(b, 1)            # metadata-only reshape

    cost = pl.CostEstimate(
        flops=2 * b * n,                        # compare + select + add
        transcendentals=b,                      # one log per example
        bytes_accessed=b * n * itemsize + b * 4 + b * 4,
    )

    out = pl.pallas_call(
        _soft_rank_ce_kernel,
        out_shape=jax.ShapeDtypeStruct((b, 1), jnp.float32),
        grid=grid,
        in_specs=[
            pl.BlockSpec((tb, 1), lambda i: (i, 0)),
            pl.BlockSpec((tb, n), lambda i: (i, 0)),
        ],
        out_specs=pl.BlockSpec((tb, 1), lambda i: (i, 0)),
        compiler_params=pltpu.CompilerParams(
            dimension_semantics=("parallel",),
            vmem_limit_bytes=_VMEM_LIMIT_BYTES,
        ),
        cost_estimate=cost,
    )(labels_2d, scores)
    return out.reshape(b)


def soft_rank_cross_entropy_loss(top_scores, true_label):
    """Single-example form matching the PyTorch module:
       loss = -log(top_scores[true_label] + 1e-10).
    Plain JAX on purpose: a single gather + log is dominated by Pallas launch
    and padding cost; batch calls should use soft_rank_cross_entropy_loss_batch."""
    scores = jnp.asarray(top_scores)
    idx = jnp.asarray(true_label, jnp.int32)
    return -jnp.log(scores[idx].astype(jnp.float32) + jnp.float32(1e-10))


if __name__ == "__main__":
    key = jax.random.PRNGKey(0)
    n_scores = 8      # e.g. top-8 candidate scores per example
    batch = 256       # small, but enough for a 2-step grid (tb = 128)

    # --- single example (exact PyTorch-module semantics, plain JAX path) ---
    raw = jax.random.normal(key, (n_scores,), dtype=jnp.float32)
    top_scores = jax.nn.softmax(raw)
    true_label = 3
    loss = soft_rank_cross_entropy_loss(top_scores, true_label)
    loss = jax.block_until_ready(loss)
    ref = -jnp.log(top_scores[true_label] + 1e-10)
    assert jnp.allclose(loss, ref, rtol=1e-6, atol=1e-6), (loss, ref)

    # --- batched Pallas kernel, float32 (native (B, N) layout, 2 grid steps) ---
    k1, k2 = jax.random.split(key)
    raw_b = jax.random.normal(k1, (batch, n_scores), dtype=jnp.float32)
    scores_b = jax.nn.softmax(raw_b, axis=-1)
    labels_b = jax.random.randint(k2, (batch,), 0, n_scores, dtype=jnp.int32)
    losses = soft_rank_cross_entropy_loss_batch(scores_b, labels_b)
    losses = jax.block_until_ready(losses)
    ref_b = -jnp.log(scores_b[jnp.arange(batch), labels_b] + 1e-10)
    assert jnp.allclose(losses, ref_b, rtol=1e-6, atol=1e-6), (losses, ref_b)

    # --- batched Pallas kernel, bfloat16 input (native dtype, cast in-kernel) ---
    scores_bf16 = scores_b.astype(jnp.bfloat16)
    losses_bf16 = soft_rank_cross_entropy_loss_batch(scores_bf16, labels_b)
    losses_bf16 = jax.block_until_ready(losses_bf16)
    ref_bf16 = -jnp.log(
        scores_bf16.astype(jnp.float32)[jnp.arange(batch), labels_b] + 1e-10)
    assert jnp.allclose(losses_bf16, ref_bf16, rtol=1e-5, atol=1e-5), (
        losses_bf16, ref_bf16)

    print("KERNEL_OK")
</pallas_src>

<mosaic_0001>
module attributes {stable_mosaic.version = 11 : i64} {
  func.func @_soft_rank_ce_kernel(%arg0: i32, %arg1: memref<128x1xi32, #tpu.memory_space<vmem>>, %arg2: memref<128x8xf32, #tpu.memory_space<vmem>>, %arg3: memref<128x1xf32, #tpu.memory_space<vmem>>) attributes {dimension_semantics = [#tpu.dimension_semantics<parallel>], iteration_bounds = array<i64: 2>, scalar_prefetch = 0 : i64, scratch_operands = 0 : i64, tpu.core_type = #tpu.core_type<tc>, window_params = [{transform_indices = @transform_0, window_bounds = array<i64: 128, 1>}, {transform_indices = @transform_1, window_bounds = array<i64: 128, 8>}, {transform_indices = @transform_2, window_bounds = array<i64: 128, 1>}]} {
    %c0 = arith.constant 0 : index
    %c0_0 = arith.constant 0 : index
    %0 = vector.load %arg1[%c0, %c0_0] : memref<128x1xi32, #tpu.memory_space<vmem>>, vector<128x1xi32>
    %c0_1 = arith.constant 0 : index
    %c0_2 = arith.constant 0 : index
    %1 = vector.load %arg2[%c0_1, %c0_2] : memref<128x8xf32, #tpu.memory_space<vmem>>, vector<128x8xf32>
    %2 = tpu.iota {dimensions = array<i32: 1>} : vector<128x8xi32>
    %3 = vector.broadcast %0 : vector<128x1xi32> to vector<128x8xi32>
    %4 = arith.cmpi eq, %2, %3 : vector<128x8xi32>
    %cst = arith.constant 0.000000e+00 : f32
    %5 = vector.broadcast %cst : f32 to vector<128x8xf32>
    %6 = arith.select %4, %1, %5 : vector<128x8xi1>, vector<128x8xf32>
    %cst_3 = arith.constant dense<0.000000e+00> : vector<128xf32>
    %7 = vector.multi_reduction <add>, %6, %cst_3 [1] : vector<128x8xf32> to vector<128xf32>
    %8 = vector.shape_cast %7 : vector<128xf32> to vector<128x1xf32>
    %cst_4 = arith.constant 1.000000e-10 : f32
    %9 = vector.broadcast %cst_4 : f32 to vector<128x1xf32>
    %10 = arith.addf %8, %9 : vector<128x1xf32>
    %11 = math.log %10 : vector<128x1xf32>
    %cst_5 = arith.constant 0.000000e+00 : f32
    %12 = vector.broadcast %cst_5 : f32 to vector<128x1xf32>
    %13 = arith.subf %12, %11 : vector<128x1xf32>
    %c0_6 = arith.constant 0 : index
    %c0_7 = arith.constant 0 : index
    %14 = vector.load %arg3[%c0_6, %c0_7] : memref<128x1xf32, #tpu.memory_space<vmem>>, vector<128x1xf32>
    tpu.vector_store %arg3[%c0_6, %c0_7], %13 {strides = array<i32>} : memref<128x1xf32, #tpu.memory_space<vmem>>, vector<128x1xf32>,
    return
  }
  func.func @transform_0(%arg0: i32) -> (i32, i32) {
    %c0_i32 = arith.constant 0 : i32
    %c0_i32_0 = arith.constant 0 : i32
    return %arg0, %c0_i32 : i32, i32
  }
  func.func @transform_1(%arg0: i32) -> (i32, i32) {
    %c0_i32 = arith.constant 0 : i32
    %c0_i32_0 = arith.constant 0 : i32
    return %arg0, %c0_i32 : i32, i32
  }
  func.func @transform_2(%arg0: i32) -> (i32, i32) {
    %c0_i32 = arith.constant 0 : i32
    %c0_i32_0 = arith.constant 0 : i32
    return %arg0, %c0_i32 : i32, i32
  }
}

</mosaic_0001>

<llo_original>
// kernel: tpu_custom_call.1
$region0: #{tpu_custom_call.1}
  #allocation0 [shape = 'u32[]', space=smem, size = 0x4, offset = 0x4, fixed_abs, tag = 'smem constant byte address 0x4 - core index']
  #allocation1 [shape = 'u32[144,128]{1,0:T(1,128)}', space=vmem, size = 0x12000, scoped, tag = 'internal scratch']
  %s0 = inlined_call_operand.vmem [shape: s32[256,1], index: 0, kind: input, shape index: {}]
  %s1 = inlined_call_operand.vmem [shape: f32[256,8], index: 1, kind: input, shape index: {}]
  %s2 = inlined_call_operand.vmem [shape: f32[256,1], index: 2, kind: output, shape index: {}]
  %s3 = sld [smem:[#allocation0]]
  $region41: #{tpu_custom_call.1} parent=0
    _
  %s5 = ssub.s32 1, %s3
  %s6 = scalar_select 0, %s5, %s3
  loop: start=0, step=1, limit=4
  $region2: #{tpu_custom_call.1} parent=0 // loop_pre_header
    _
  $region3: #{tpu_custom_call.1} parent=0 // loop_header
    %s8 = sphi 0, %s12
    %p9 = scmp.ge.s32.totalorder %s8, 4
    %s18 = sphi 0, %s20
    %s21 = sphi 0, %s18
    %s22 = sphi 0, %s21
    %s38 = sphi 0, %s22
    %s44 = sphi 0, %s46
    %s47 = sphi 0, %s44
    %s48 = sphi 0, %s47
    %s64 = sphi 0, %s48
    %s70 = sphi 0, %s72
    %s73 = sphi 0, %s70
    %s74 = sphi 0, %s73
    %s90 = sphi 0, %s74
  $region4: #{tpu_custom_call.1} parent=0 // loop_header_branch
    %11 = sbr.rel (%p9) target = $region8
  $region5: #{tpu_custom_call.1} parent=0 // loop_body
    %s13 = ssub.s32 %s8, 1
    %s14 = ssub.s32 %s8, 2
    %s15 = sadd.s32 %s8, 1
    %s16 = ssub.s32 %s8, %s15
    %p17 = scmp.eq.s32.totalorder %s16, 0
    %s19 = sadd.s32 %s18, 1
    %s20 = scalar_select %p17, %s18, %s19
    %p23 = pneg %p17
    %p24 = scmp.eq.s32.totalorder %s8, 1
    %p25 = por %p23, %p24
    %p26 = scmp.ne.s32.totalorder %s18, %s21
    %p27 = scmp.eq.s32.totalorder %s8, 0
    %p28 = por %p26, %p27
    %p29 = scmp.ne.s32.totalorder %s18, %s21
    %p30 = scmp.eq.s32.totalorder %s13, 1
    %p31 = por %p29, %p30
    %p32 = scmp.ne.s32.totalorder %s21, %s22
    %p33 = scmp.eq.s32.totalorder %s13, 0
    %p34 = por %p32, %p33
    %p35 = scmp.ne.s32.totalorder %s21, %s22
    %p36 = scmp.eq.s32.totalorder %s14, 1
    %p37 = por %p35, %p36
    %p39 = scmp.ne.s32.totalorder %s22, %s38
    %p40 = scmp.eq.s32.totalorder %s14, 0
    %p41 = por %p39, %p40
    %s42 = ssub.s32 %s8, %s15
    %p43 = scmp.eq.s32.totalorder %s42, 0
    %s45 = sadd.s32 %s44, 1
    %s46 = scalar_select %p43, %s44, %s45
    %p49 = pneg %p43
    %p50 = scmp.eq.s32.totalorder %s8, 1
    %p51 = por %p49, %p50
    %p52 = scmp.ne.s32.totalorder %s44, %s47
    %p53 = scmp.eq.s32.totalorder %s8, 0
    %p54 = por %p52, %p53
    %p55 = scmp.ne.s32.totalorder %s44, %s47
    %p56 = scmp.eq.s32.totalorder %s13, 1
    %p57 = por %p55, %p56
    %p58 = scmp.ne.s32.totalorder %s47, %s48
    %p59 = scmp.eq.s32.totalorder %s13, 0
    %p60 = por %p58, %p59
    %p61 = scmp.ne.s32.totalorder %s47, %s48
    %p62 = scmp.eq.s32.totalorder %s14, 1
    %p63 = por %p61, %p62
    %p65 = scmp.ne.s32.totalorder %s48, %s64
    %p66 = scmp.eq.s32.totalorder %s14, 0
    %p67 = por %p65, %p66
    %s68 = ssub.s32 %s8, %s15
    %p69 = scmp.eq.s32.totalorder %s68, 0
    %s71 = sadd.s32 %s70, 1
    %s72 = scalar_select %p69, %s70, %s71
    %p75 = pneg %p69
    %p76 = scmp.eq.s32.totalorder %s8, 1
    %p77 = por %p75, %p76
    %p78 = scmp.ne.s32.totalorder %s70, %s73
    %p79 = scmp.eq.s32.totalorder %s8, 0
    %p80 = por %p78, %p79
    %p81 = scmp.ne.s32.totalorder %s70, %s73
    %p82 = scmp.eq.s32.totalorder %s13, 1
    %p83 = por %p81, %p82
    %p84 = scmp.ne.s32.totalorder %s73, %s74
    %p85 = scmp.eq.s32.totalorder %s13, 0
    %p86 = por %p84, %p85
    %p87 = scmp.ne.s32.totalorder %s73, %s74
    %p88 = scmp.eq.s32.totalorder %s14, 1
    %p89 = por %p87, %p88
    %p91 = scmp.ne.s32.totalorder %s74, %s90
    %p92 = scmp.eq.s32.totalorder %s14, 0
    %p93 = por %p91, %p92
    %p94 = scmp.le.s32.totalorder 1, %s8
    %p95 = scmp.lt.s32.totalorder %s8, 3
    %p96 = pnand %p94, %p95
    %p97 = pneg %p96
    // Predicated region
    $region9: #{tpu_custom_call.1} parent=5 // pred_check
      _
    $region10: #{tpu_custom_call.1} parent=5 // pred_check_branch
      %99 = sbr.rel (%p96) target = $region12
    $region11: #{tpu_custom_call.1} parent=5 // pred_region
      %s100 = ssub.s32 %s8, 1
    $region12: #{tpu_custom_call.1} parent=5 // pred_fallthru
      _
    %p101 = scmp.lt.s32.totalorder %s8, 2
    // Predicated region
    $region13: #{tpu_custom_call.1} parent=5 // pred_check
      %p102 = pneg %p101
    $region14: #{tpu_custom_call.1} parent=5 // pred_check_branch
      %104 = sbr.rel (%p102) target = $region16
    $region15: #{tpu_custom_call.1} parent=5 // pred_region
      // Predicated region
      $region17: #{tpu_custom_call.1} parent=15 // pred_check
        %p105 = pneg %p28
      $region18: #{tpu_custom_call.1} parent=15 // pred_check_branch
        %107 = sbr.rel (%p105) target = $region20
      $region19: #{tpu_custom_call.1} parent=15 // pred_region
        %s108 = smul.u32 16, %s8
        %p109 = scmp.lt.s32.totalorder %s108, 31
        %s110 = scalar_select %p109, %s108, 31
        %s111 = smul.addr %s110, 8
        %s112 = scalar_lea.vmem %s0, %s111
        %s113 = smul.u32 16, %s8
      $region20: #{tpu_custom_call.1} parent=15 // pred_fallthru
        _
      // Predicated region
      $region21: #{tpu_custom_call.1} parent=15 // pred_check
        %p114 = pneg %p54
      $region22: #{tpu_custom_call.1} parent=15 // pred_check_branch
        %116 = sbr.rel (%p114) target = $region24
      $region23: #{tpu_custom_call.1} parent=15 // pred_region
        %s117 = smul.u32 16, %s8
        %p118 = scmp.lt.s32.totalorder %s117, 31
        %s119 = scalar_select %p118, %s117, 31
        %s120 = smul.addr %s119, 8
        %s121 = scalar_lea.vmem %s1, %s120
        %s122 = smul.u32 16, %s8
      $region24: #{tpu_custom_call.1} parent=15 // pred_fallthru
        _
    $region16: #{tpu_custom_call.1} parent=5 // pred_fallthru
      _
    %p123 = scmp.le.s32.totalorder 1, %s8
    %p124 = scmp.lt.s32.totalorder %s8, 3
    %p125 = pnand %p123, %p124
    %p126 = pneg %p125
    // Predicated region
    $region25: #{tpu_custom_call.1} parent=5 // pred_check
      _
    $region26: #{tpu_custom_call.1} parent=5 // pred_check_branch
      %128 = sbr.rel (%p125) target = $region28
    $region27: #{tpu_custom_call.1} parent=5 // pred_region
      %s129 = ssub.s32 %s8, 1
      %s130 = smul.u32 16, %s13
      %p131 = scmp.lt.s32.totalorder %s130, 31
      %s132 = scalar_select %p131, %s130, 31
      %s133 = smul.addr %s132, 8
      %s134 = scalar_lea.vmem %s0, %s133
      %p135 = pneg %p34
      %p136 = pneg %p31
      %s137 = smul.u32 16, %s13
      %p138 = scmp.lt.s32.totalorder %s137, 31
      %s139 = scalar_select %p138, %s137, 31
      %s140 = smul.addr %s139, 8
      %s141 = scalar_lea.vmem %s1, %s140
      %p142 = pneg %p60
      %p143 = pneg %p57
      %p144 = pneg %p86
      %p145 = pneg %p83
      %s146 = smul.u32 16, %s13
      %p147 = scmp.lt.s32.totalorder %s146, 31
      %s148 = scalar_select %p147, %s146, 31
      %s149 = smul.addr %s148, 8
      %s150 = scalar_lea.vmem %s2, %s149
      %s151 = smul.u32 16, %s13
      %p152 = scmp.lt.s32.totalorder %s151, 31
      %s153 = scalar_select %p152, %s151, 31
      %s154 = smul.addr %s153, 8
      %s155 = scalar_lea.vmem %s0, %s154
      %s156 = smul.u32 16, %s13
      %s157 = smul.u32 16, %s13
      %p158 = scmp.lt.s32.totalorder %s157, 31
      %s159 = scalar_select %p158, %s157, 31
      %s160 = smul.addr %s159, 8
      %s161 = scalar_lea.vmem %s1, %s160
      %s162 = smul.u32 16, %s13
      %s163 = smul.u32 16, %s13
      %p164 = scmp.lt.s32.totalorder %s163, 31
      %s165 = scalar_select %p164, %s163, 31
      %s166 = smul.addr %s165, 8
      %s167 = scalar_lea.vmem %s2, %s166
      %s168 = smul.u32 16, %s13
      %v169 = vld [vmem:[%s155] sm:$0xff]
      %v170 = vld [vmem:[%s155 + $0x8] sm:$0xff]
      %v171 = vld [vmem:[%s155 + $0x10] sm:$0xff]
      %v172 = vld [vmem:[%s155 + $0x18] sm:$0xff]
      %v173 = vld [vmem:[%s155 + $0x20] sm:$0xff]
      %v174 = vld [vmem:[%s155 + $0x28] sm:$0xff]
      %v175 = vld [vmem:[%s155 + $0x30] sm:$0xff]
      %v176 = vld [vmem:[%s155 + $0x38] sm:$0xff]
      %v177 = vld [vmem:[%s155 + $0x40] sm:$0xff]
      %v178 = vld [vmem:[%s155 + $0x48] sm:$0xff]
      %v179 = vld [vmem:[%s155 + $0x50] sm:$0xff]
      %v180 = vld [vmem:[%s155 + $0x58] sm:$0xff]
      %v181 = vld [vmem:[%s155 + $0x60] sm:$0xff]
      %v182 = vld [vmem:[%s155 + $0x68] sm:$0xff]
      %v183 = vld [vmem:[%s155 + $0x70] sm:$0xff]
      %v184 = vld [vmem:[%s155 + $0x78] sm:$0xff]
      %v185 = vld [vmem:[%s161] sm:$0xff]
      %v186 = vld [vmem:[%s161 + $0x8] sm:$0xff]
      %v187 = vld [vmem:[%s161 + $0x10] sm:$0xff]
      %v188 = vld [vmem:[%s161 + $0x18] sm:$0xff]
      %v189 = vld [vmem:[%s161 + $0x20] sm:$0xff]
      %v190 = vld [vmem:[%s161 + $0x28] sm:$0xff]
      %v191 = vld [vmem:[%s161 + $0x30] sm:$0xff]
      %v192 = vld [vmem:[%s161 + $0x38] sm:$0xff]
      %v193 = vld [vmem:[%s161 + $0x40] sm:$0xff]
      %v194 = vld [vmem:[%s161 + $0x48] sm:$0xff]
      %v195 = vld [vmem:[%s161 + $0x50] sm:$0xff]
      %v196 = vld [vmem:[%s161 + $0x58] sm:$0xff]
      %v197 = vld [vmem:[%s161 + $0x60] sm:$0xff]
      %v198 = vld [vmem:[%s161 + $0x68] sm:$0xff]
      %v199 = vld [vmem:[%s161 + $0x70] sm:$0xff]
      %v200 = vld [vmem:[%s161 + $0x78] sm:$0xff]
      %v201 = vlaneseq
      %v202 = vand.u32 %v201, 127
      %203 = vset.pattern.permute.xlu0 0
      %204 = vperm.xlu0 %203, %v169
      %v205 = vpop.permute.xlu0 %204
      %206 = vset.pattern.permute.xlu0 0
      %207 = vperm.xlu0 %206, %v170
      %v208 = vpop.permute.xlu0 %207
      %209 = vset.pattern.permute.xlu0 0
      %210 = vperm.xlu0 %209, %v171
      %v211 = vpop.permute.xlu0 %210
      %212 = vset.pattern.permute.xlu0 0
      %213 = vperm.xlu0 %212, %v172
      %v214 = vpop.permute.xlu0 %213
      %215 = vset.pattern.permute.xlu0 0
      %216 = vperm.xlu0 %215, %v173
      %v217 = vpop.permute.xlu0 %216
      %218 = vset.pattern.permute.xlu0 0
      %219 = vperm.xlu0 %218, %v174
      %v220 = vpop.permute.xlu0 %219
      %221 = vset.pattern.permute.xlu0 0
      %222 = vperm.xlu0 %221, %v175
      %v223 = vpop.permute.xlu0 %222
      %224 = vset.pattern.permute.xlu0 0
      %225 = vperm.xlu0 %224, %v176
      %v226 = vpop.permute.xlu0 %225
      %227 = vset.pattern.permute.xlu0 0
      %228 = vperm.xlu0 %227, %v177
      %v229 = vpop.permute.xlu0 %228
      %230 = vset.pattern.permute.xlu0 0
      %231 = vperm.xlu0 %230, %v178
      %v232 = vpop.permute.xlu0 %231
      %233 = vset.pattern.permute.xlu0 0
      %234 = vperm.xlu0 %233, %v179
      %v235 = vpop.permute.xlu0 %234
      %236 = vset.pattern.permute.xlu0 0
      %237 = vperm.xlu0 %236, %v180
      %v238 = vpop.permute.xlu0 %237
      %239 = vset.pattern.permute.xlu0 0
      %240 = vperm.xlu0 %239, %v181
      %v241 = vpop.permute.xlu0 %240
      %242 = vset.pattern.permute.xlu0 0
      %243 = vperm.xlu0 %242, %v182
      %v244 = vpop.permute.xlu0 %243
      %245 = vset.pattern.permute.xlu0 0
      %246 = vperm.xlu0 %245, %v183
      %v247 = vpop.permute.xlu0 %246
      %248 = vset.pattern.permute.xlu0 0
      %249 = vperm.xlu0 %248, %v184
      %v250 = vpop.permute.xlu0 %249
      %vm251 = vcmp.eq.s32.totalorder %v202, %v205
      %vm252 = vcmp.eq.s32.totalorder %v202, %v208
      %vm253 = vcmp.eq.s32.totalorder %v202, %v211
      %vm254 = vcmp.eq.s32.totalorder %v202, %v214
      %vm255 = vcmp.eq.s32.totalorder %v202, %v217
      %vm256 = vcmp.eq.s32.totalorder %v202, %v220
      %vm257 = vcmp.eq.s32.totalorder %v202, %v223
      %vm258 = vcmp.eq.s32.totalorder %v202, %v226
      %vm259 = vcmp.eq.s32.totalorder %v202, %v229
      %vm260 = vcmp.eq.s32.totalorder %v202, %v232
      %vm261 = vcmp.eq.s32.totalorder %v202, %v235
      %vm262 = vcmp.eq.s32.totalorder %v202, %v238
      %vm263 = vcmp.eq.s32.totalorder %v202, %v241
      %vm264 = vcmp.eq.s32.totalorder %v202, %v244
      %vm265 = vcmp.eq.s32.totalorder %v202, %v247
      %vm266 = vcmp.eq.s32.totalorder %v202, %v250
      %v267 = vsel %vm251, %v185, 0.0
      %v268 = vsel %vm252, %v186, 0.0
      %v269 = vsel %vm253, %v187, 0.0
      %v270 = vsel %vm254, %v188, 0.0
      %v271 = vsel %vm255, %v189, 0.0
      %v272 = vsel %vm256, %v190, 0.0
      %v273 = vsel %vm257, %v191, 0.0
      %v274 = vsel %vm258, %v192, 0.0
      %v275 = vsel %vm259, %v193, 0.0
      %v276 = vsel %vm260, %v194, 0.0
      %v277 = vsel %vm261, %v195, 0.0
      %v278 = vsel %vm262, %v196, 0.0
      %v279 = vsel %vm263, %v197, 0.0
      %v280 = vsel %vm264, %v198, 0.0
      %v281 = vsel %vm265, %v199, 0.0
      %v282 = vsel %vm266, %v200, 0.0
      %vm283 = vcmask 64512
      %v284 = vsel %vm283, %v267, 0.0
      %285 = vadd.xlane.f32.xlu0 %v284
      %v286 = vpop.xlane.xlu0 %285
      %v287 = vsel %vm283, %v268, 0.0
      %288 = vadd.xlane.f32.xlu0 %v287
      %v289 = vpop.xlane.xlu0 %288
      %v290 = vsel %vm283, %v269, 0.0
      %291 = vadd.xlane.f32.xlu0 %v290
      %v292 = vpop.xlane.xlu0 %291
      %v293 = vsel %vm283, %v270, 0.0
      %294 = vadd.xlane.f32.xlu0 %v293
      %v295 = vpop.xlane.xlu0 %294
      %v296 = vsel %vm283, %v271, 0.0
      %297 = vadd.xlane.f32.xlu0 %v296
      %v298 = vpop.xlane.xlu0 %297
      %v299 = vsel %vm283, %v272, 0.0
      %300 = vadd.xlane.f32.xlu0 %v299
      %v301 = vpop.xlane.xlu0 %300
      %v302 = vsel %vm283, %v273, 0.0
      %303 = vadd.xlane.f32.xlu0 %v302
      %v304 = vpop.xlane.xlu0 %303
      %v305 = vsel %vm283, %v274, 0.0
      %306 = vadd.xlane.f32.xlu0 %v305
      %v307 = vpop.xlane.xlu0 %306
      %v308 = vsel %vm283, %v275, 0.0
      %309 = vadd.xlane.f32.xlu0 %v308
      %v310 = vpop.xlane.xlu0 %309
      %v311 = vsel %vm283, %v276, 0.0
      %312 = vadd.xlane.f32.xlu0 %v311
      %v313 = vpop.xlane.xlu0 %312
      %v314 = vsel %vm283, %v277, 0.0
      %315 = vadd.xlane.f32.xlu0 %v314
      %v316 = vpop.xlane.xlu0 %315
      %v317 = vsel %vm283, %v278, 0.0
      %318 = vadd.xlane.f32.xlu0 %v317
      %v319 = vpop.xlane.xlu0 %318
      %v320 = vsel %vm283, %v279, 0.0
      %321 = vadd.xlane.f32.xlu0 %v320
      %v322 = vpop.xlane.xlu0 %321
      %v323 = vsel %vm283, %v280, 0.0
      %324 = vadd.xlane.f32.xlu0 %v323
      %v325 = vpop.xlane.xlu0 %324
      %v326 = vsel %vm283, %v281, 0.0
      %327 = vadd.xlane.f32.xlu0 %v326
      %v328 = vpop.xlane.xlu0 %327
      %v329 = vsel %vm283, %v282, 0.0
      %330 = vadd.xlane.f32.xlu0 %v329
      %v331 = vpop.xlane.xlu0 %330
      %v332 = vadd.f32 %v286, 1e-10
      %v333 = vadd.f32 %v289, 1e-10
      %v334 = vadd.f32 %v292, 1e-10
      %v335 = vadd.f32 %v295, 1e-10
      %v336 = vadd.f32 %v298, 1e-10
      %v337 = vadd.f32 %v301, 1e-10
      %v338 = vadd.f32 %v304, 1e-10
      %v339 = vadd.f32 %v307, 1e-10
      %v340 = vadd.f32 %v310, 1e-10
      %v341 = vadd.f32 %v313, 1e-10
      %v342 = vadd.f32 %v316, 1e-10
      %v343 = vadd.f32 %v319, 1e-10
      %v344 = vadd.f32 %v322, 1e-10
      %v345 = vadd.f32 %v325, 1e-10
      %v346 = vadd.f32 %v328, 1e-10
      %v347 = vadd.f32 %v331, 1e-10
      %v348 = vlog2.pop %v332
      %v349 = vmul.f32 %v348, 0.6931472
      %v350 = vlog2.pop %v333
      %v351 = vmul.f32 %v350, 0.6931472
      %v352 = vlog2.pop %v334
      %v353 = vmul.f32 %v352, 0.6931472
      %v354 = vlog2.pop %v335
      %v355 = vmul.f32 %v354, 0.6931472
      %v356 = vlog2.pop %v336
      %v357 = vmul.f32 %v356, 0.6931472
      %v358 = vlog2.pop %v337
      %v359 = vmul.f32 %v358, 0.6931472
      %v360 = vlog2.pop %v338
      %v361 = vmul.f32 %v360, 0.6931472
      %v362 = vlog2.pop %v339
      %v363 = vmul.f32 %v362, 0.6931472
      %v364 = vlog2.pop %v340
      %v365 = vmul.f32 %v364, 0.6931472
      %v366 = vlog2.pop %v341
      %v367 = vmul.f32 %v366, 0.6931472
      %v368 = vlog2.pop %v342
      %v369 = vmul.f32 %v368, 0.6931472
      %v370 = vlog2.pop %v343
      %v371 = vmul.f32 %v370, 0.6931472
      %v372 = vlog2.pop %v344
      %v373 = vmul.f32 %v372, 0.6931472
      %v374 = vlog2.pop %v345
      %v375 = vmul.f32 %v374, 0.6931472
      %v376 = vlog2.pop %v346
      %v377 = vmul.f32 %v376, 0.6931472
      %v378 = vlog2.pop %v347
      %v379 = vmul.f32 %v378, 0.6931472
      %v380 = vsub.f32 0.0, %v349
      %v381 = vsub.f32 0.0, %v351
      %v382 = vsub.f32 0.0, %v353
      %v383 = vsub.f32 0.0, %v355
      %v384 = vsub.f32 0.0, %v357
      %v385 = vsub.f32 0.0, %v359
      %v386 = vsub.f32 0.0, %v361
      %v387 = vsub.f32 0.0, %v363
      %v388 = vsub.f32 0.0, %v365
      %v389 = vsub.f32 0.0, %v367
      %v390 = vsub.f32 0.0, %v369
      %v391 = vsub.f32 0.0, %v371
      %v392 = vsub.f32 0.0, %v373
      %v393 = vsub.f32 0.0, %v375
      %v394 = vsub.f32 0.0, %v377
      %v395 = vsub.f32 0.0, %v379
      %vm396 = vcmask 7168
      %397 = vst.msk [vmem:[%s167] sm:$0xff] %vm396, %v380
      %398 = vst.msk [vmem:[%s167 + $0x8] sm:$0xff] %vm396, %v381
      %399 = vst.msk [vmem:[%s167 + $0x10] sm:$0xff] %vm396, %v382
      %400 = vst.msk [vmem:[%s167 + $0x18] sm:$0xff] %vm396, %v383
      %401 = vst.msk [vmem:[%s167 + $0x20] sm:$0xff] %vm396, %v384
      %402 = vst.msk [vmem:[%s167 + $0x28] sm:$0xff] %vm396, %v385
      %403 = vst.msk [vmem:[%s167 + $0x30] sm:$0xff] %vm396, %v386
      %404 = vst.msk [vmem:[%s167 + $0x38] sm:$0xff] %vm396, %v387
      %405 = vst.msk [vmem:[%s167 + $0x40] sm:$0xff] %vm396, %v388
      %406 = vst.msk [vmem:[%s167 + $0x48] sm:$0xff] %vm396, %v389
      %407 = vst.msk [vmem:[%s167 + $0x50] sm:$0xff] %vm396, %v390
      %408 = vst.msk [vmem:[%s167 + $0x58] sm:$0xff] %vm396, %v391
      %409 = vst.msk [vmem:[%s167 + $0x60] sm:$0xff] %vm396, %v392
      %410 = vst.msk [vmem:[%s167 + $0x68] sm:$0xff] %vm396, %v393
      %411 = vst.msk [vmem:[%s167 + $0x70] sm:$0xff] %vm396, %v394
      %412 = vst.msk [vmem:[%s167 + $0x78] sm:$0xff] %vm396, %v395
      %s413 = smul.u32 16, %s13
      %p414 = scmp.lt.s32.totalorder %s413, 31
      %s415 = scalar_select %p414, %s413, 31
      %s416 = smul.addr %s415, 8
      %s417 = scalar_lea.vmem %s2, %s416
      // Predicated region
      $region29: #{tpu_custom_call.1} parent=27 // pred_check
        %p418 = pneg %p83
      $region30: #{tpu_custom_call.1} parent=27 // pred_check_branch
        %420 = sbr.rel (%p418) target = $region32
      $region31: #{tpu_custom_call.1} parent=27 // pred_region
        %s421 = smul.u32 16, %s13
      $region32: #{tpu_custom_call.1} parent=27 // pred_fallthru
        _
    $region28: #{tpu_custom_call.1} parent=5 // pred_fallthru
      _
    %p422 = scmp.le.s32.totalorder 2, %s8
    // Predicated region
    $region33: #{tpu_custom_call.1} parent=5 // pred_check
      %p423 = pneg %p422
    $region34: #{tpu_custom_call.1} parent=5 // pred_check_branch
      %425 = sbr.rel (%p423) target = $region36
    $region35: #{tpu_custom_call.1} parent=5 // pred_region
      %s426 = ssub.s32 %s8, 2
      // Predicated region
      $region37: #{tpu_custom_call.1} parent=35 // pred_check
        %p427 = pneg %p89
      $region38: #{tpu_custom_call.1} parent=35 // pred_check_branch
        %429 = sbr.rel (%p427) target = $region40
      $region39: #{tpu_custom_call.1} parent=35 // pred_region
        %s430 = smul.u32 16, %s14
        %p431 = scmp.lt.s32.totalorder %s430, 31
        %s432 = scalar_select %p431, %s430, 31
        %s433 = smul.addr %s432, 8
        %s434 = scalar_lea.vmem %s2, %s433
      $region40: #{tpu_custom_call.1} parent=35 // pred_fallthru
        _
    $region36: #{tpu_custom_call.1} parent=5 // pred_fallthru
      _
  $region6: #{tpu_custom_call.1} parent=0 // loop_footer
    %s12 = sadd.s32 1, %s8
  $region7: #{tpu_custom_call.1} parent=0 // loop_footer_branch
    %7 = sbr.rel target = $region3
  $region8: #{tpu_custom_call.1} parent=0 // loop_exit
    _

</llo_original>
